<compile_context>
chip_gen: v7x
topology: tpu7x:2x2x1
jax: 0.10.0
libtpu: 0.0.40
codegen_flags: <defaults>
</compile_context>

<pallas_src>
import functools
import math

import jax
import jax.numpy as jnp
from jax.experimental import pallas as pl
from jax.experimental.pallas import tpu as pltpu

# pywt.Wavelet('db3').dec_lo — deterministic, hardcoded (no pywt / checkpoint).
_DB3_DEC_LO = (
    0.0352262918821007,
    -0.0854412738822415,
    -0.1350110200102546,
    0.4598775021193313,
    0.8068915093133388,
    0.3326705529509569,
)
_K = len(_DB3_DEC_LO)
# pywt QMF relation: dec_hi[k] = (-1)^(k+1) * dec_lo[K-1-k]
_DB3_DEC_HI = tuple((-1.0) ** (k + 1) * _DB3_DEC_LO[_K - 1 - k] for k in range(_K))
# The torch module uses dec_hi[::-1] as the (cross-correlation) conv filter.
_FILTER = tuple(_DB3_DEC_HI[::-1])

_MAX_B_TILE = 8  # static per-b unroll bound (keeps code size / live ranges small)


def _compute_pad_amount(input_sz, kernel_sz, dilation, stride):
    # Exact copy of the PyTorch helper (== (K-1)*dilation for stride=1).
    unpadded_out_sz = (input_sz - kernel_sz - (kernel_sz - 1) * (dilation - 1)) / stride + 1
    unpadded_out_sz = int(math.ceil(unpadded_out_sz))
    return input_sz - unpadded_out_sz


def _highpass_kernel(x_ref, o_ref, *, filt, dilation):
    # x_ref / o_ref: (B_TILE, T, C_TILE) blocks in VMEM.
    #
    # out[t, c] = sum_k filt[k] * x[min(t + k*dilation, T-1), c]
    # (depthwise FIR with the replicate right-pad folded in — no padded copy
    # ever touches HBM).
    Bt, T, Ct = x_ref.shape
    K = len(filt)
    pad = (K - 1) * dilation
    P = min(pad, T)  # number of trailing rows that can see the replicate pad

    for b in range(Bt):  # Bt <= _MAX_B_TILE: small static unroll
        xv = x_ref[b].astype(jnp.float32)   # (T, Ct) resident slab, one load
        last = xv[T - 1:T, :]               # (1, Ct) replicate-pad source row

        # ---- bulk rows [0, T-P): plain rolled taps, running accumulator ----
        # pltpu.roll wraps; the wrapped (wrong) rows of every tap live in the
        # last P rows, which are overwritten by the tail-strip store below.
        if P < T:
            acc = filt[0] * xv              # shift-0 tap
            for k in range(1, K):
                s = k * dilation            # 0 < s <= pad = P < T here
                acc = acc + filt[k] * pltpu.roll(xv, T - s, axis=0)
            o_ref[b] = acc.astype(o_ref.dtype)

        # ---- tail strip [T-P, T): replicate-clamped taps on a small slab ----
        strip = None
        for k, w in enumerate(filt):
            s = k * dilation
            n_keep = max(0, P - s)          # strip rows whose tap stays in range
            n_clamp = P - n_keep            # strip rows clamped to the last sample
            if n_clamp == 0:                # only the shift-0 tap
                tap = xv[T - P:T, :]
            elif n_keep == 0:               # tap lands entirely in the pad region
                tap = jnp.broadcast_to(last, (P, Ct))
            else:
                tap = jnp.concatenate(
                    [xv[T - P + s:T, :], jnp.broadcast_to(last, (n_clamp, Ct))],
                    axis=0)
            strip = w * tap if strip is None else strip + w * tap
        o_ref[b, T - P:T, :] = strip.astype(o_ref.dtype)


def _vmem_budget_bytes():
    """Generation-aware scoped-VMEM budget (~0.55 * capacity, capped at 48 MiB)."""
    cap = None
    try:
        info = pltpu.get_tpu_info()
        cap = getattr(info, "vmem_capacity_bytes", None)
    except Exception:
        cap = None
    if not cap:
        cap = 64 * 1024 * 1024  # conservative fallback: v7x per-TC physical VMEM
    return min(48 * 1024 * 1024, int(0.55 * cap))


def _choose_tiles(B, T, C, itemsize, budget_bytes, c_tile=None, b_tile=None):
    """Pick (b_tile, c_tile) so blocks are lane-dense, exactly cover the array,
    and 2x(in)+2x(out) buffers plus ~3 f32 temporaries fit the VMEM budget."""
    # Per-buffer block target: 4 pipelined io buffers + in-kernel temps ~= 8x.
    target = max(budget_bytes // 8, 128 * 1024)

    if c_tile is None:
        if C % 128 != 0:
            ct = C  # lane dim must be a multiple of 128 or the full dim
            # TODO(synk): wrapper-side layout plumbing to present a lane-dense
            # (multiple-of-128) channel dim when C is not a multiple of 128.
        else:
            ct, cand = 128, 128
            while cand <= C:
                if C % cand == 0 and T * cand * itemsize <= target:
                    ct = cand
                cand += 128
            # TODO(synk): tile T with a (K-1)*dilation halo if T alone ever
            # exceeds the budget at ct=128 (not needed for YouTube-8M frames).
    else:
        ct = c_tile

    if b_tile is None:
        per_b = T * ct * itemsize
        bt = int(max(1, min(B, _MAX_B_TILE, target // per_b)))
        while B % bt != 0:  # full blocks only: no ragged/masked trailing tile
            bt -= 1
    else:
        bt = b_tile
    return bt, ct


def highpass_filter(x, *, dilation=1, c_tile=None, b_tile=None):
    """x: (B, T, C) -> (B, T, C), db3 high-pass FIR along T per channel."""
    B, T, C = x.shape
    # Faithful to the torch forward: pad amount is computed from the channel
    # dim (x.shape[1] after its permute); for stride=1 it equals (K-1)*dilation
    # and is realized inside the kernel by clamping, not by an HBM pad copy.
    pad = _compute_pad_amount(C, _K, dilation, 1)
    assert pad == (_K - 1) * dilation

    budget = _vmem_budget_bytes()
    bt, ct = _choose_tiles(B, T, C, x.dtype.itemsize, budget, c_tile, b_tile)

    grid = (pl.cdiv(B, bt), pl.cdiv(C, ct))
    kernel = functools.partial(_highpass_kernel, filt=_FILTER, dilation=dilation)

    return pl.pallas_call(
        kernel,
        out_shape=jax.ShapeDtypeStruct((B, T, C), x.dtype),
        grid_spec=pltpu.PrefetchScalarGridSpec(
            num_scalar_prefetch=0,
            grid=grid,
            in_specs=[pl.BlockSpec((bt, T, ct), lambda b, c: (b, 0, c))],
            out_specs=pl.BlockSpec((bt, T, ct), lambda b, c: (b, 0, c)),
        ),
        compiler_params=pltpu.CompilerParams(
            dimension_semantics=("parallel", "parallel"),
            vmem_limit_bytes=budget,
        ),
    )(x)


if __name__ == "__main__":
    key = jax.random.PRNGKey(0)
    k1, k2, k3, k4, k5 = jax.random.split(key, 5)

    def reference(x, dilation):
        # Pure-JAX reference of the module semantics: replicate right-pad by
        # (K-1)*dilation, then the depthwise cross-correlation FIR.
        T = x.shape[1]
        pad = (_K - 1) * dilation
        x_pad = jnp.pad(x, ((0, 0), (0, pad), (0, 0)), mode="edge")
        return sum(w * x_pad[:, k * dilation:k * dilation + T, :]
                   for k, w in enumerate(_FILTER))

    # Case 1: (B, T, C) = (2, 16, 128), dilation=1 (bulk + tail-strip paths).
    x1 = jax.random.normal(k1, (2, 16, 128), dtype=jnp.float32)
    o1 = jax.block_until_ready(highpass_filter(x1, dilation=1))
    assert o1.shape == x1.shape and o1.dtype == x1.dtype
    assert jnp.allclose(o1, reference(x1, 1), atol=1e-5, rtol=1e-5)

    # Case 2: dilation=2 with T=8 -> pad >= T, strip-only path.
    x2 = jax.random.normal(k2, (2, 8, 128), dtype=jnp.float32)
    o2 = jax.block_until_ready(highpass_filter(x2, dilation=2))
    assert jnp.allclose(o2, reference(x2, 2), atol=1e-5, rtol=1e-5)

    # Case 3: channel-tiled grid path (C=256 split into 2 x 128 lane tiles).
    x3 = jax.random.normal(k3, (1, 16, 256), dtype=jnp.float32)
    o3 = jax.block_until_ready(highpass_filter(x3, dilation=1, c_tile=128))
    assert jnp.allclose(o3, reference(x3, 1), atol=1e-5, rtol=1e-5)

    # Case 4: batch-fattened blocks (B=16 -> b_tile=8, grid (2, 1)).
    x4 = jax.random.normal(k4, (16, 8, 128), dtype=jnp.float32)
    o4 = jax.block_until_ready(highpass_filter(x4, dilation=1))
    assert jnp.allclose(o4, reference(x4, 1), atol=1e-5, rtol=1e-5)

    # Case 5: C not a multiple of 128 (full-dim lane block) + dilation=2 bulk.
    x5 = jax.random.normal(k5, (2, 32, 96), dtype=jnp.float32)
    o5 = jax.block_until_ready(highpass_filter(x5, dilation=2))
    assert jnp.allclose(o5, reference(x5, 2), atol=1e-5, rtol=1e-5)

    print("KERNEL_OK")
</pallas_src>

<mosaic_0001>
module attributes {stable_mosaic.version = 11 : i64} {
  func.func @_highpass_kernel(%arg0: i32, %arg1: i32, %arg2: memref<2x16x128xf32, #tpu.memory_space<vmem>>, %arg3: memref<2x16x128xf32, #tpu.memory_space<vmem>>) attributes {dimension_semantics = [#tpu.dimension_semantics<parallel>, #tpu.dimension_semantics<parallel>], iteration_bounds = array<i64: 1, 1>, scalar_prefetch = 0 : i64, scratch_operands = 0 : i64, tpu.core_type = #tpu.core_type<tc>, window_params = [{transform_indices = @transform_0, window_bounds = array<i64: 2, 16, 128>}, {transform_indices = @transform_1, window_bounds = array<i64: 2, 16, 128>}]} {
    %c0 = arith.constant 0 : index
    %c0_0 = arith.constant 0 : index
    %c0_1 = arith.constant 0 : index
    %0 = vector.load %arg2[%c0, %c0_0, %c0_1] : memref<2x16x128xf32, #tpu.memory_space<vmem>>, vector<1x16x128xf32>
    %1 = vector.shape_cast %0 : vector<1x16x128xf32> to vector<16x128xf32>
    %2 = vector.extract_strided_slice %1 {offsets = [15, 0], sizes = [1, 128], strides = [1, 1]} : vector<16x128xf32> to vector<1x128xf32>
    %cst = arith.constant 0.0352262929 : f32
    %3 = vector.broadcast %cst : f32 to vector<16x128xf32>
    %4 = arith.mulf %3, %1 : vector<16x128xf32>
    %c15_i32 = arith.constant 15 : i32
    %5 = tpu.dynamic_rotate %1 by %c15_i32 dim 0 : vector<16x128xf32>, i32 -> vector<16x128xf32>
    %cst_2 = arith.constant 0.0854412764 : f32
    %6 = vector.broadcast %cst_2 : f32 to vector<16x128xf32>
    %7 = arith.mulf %6, %5 : vector<16x128xf32>
    %8 = arith.addf %4, %7 : vector<16x128xf32>
    %c14_i32 = arith.constant 14 : i32
    %9 = tpu.dynamic_rotate %1 by %c14_i32 dim 0 : vector<16x128xf32>, i32 -> vector<16x128xf32>
    %cst_3 = arith.constant -0.135011017 : f32
    %10 = vector.broadcast %cst_3 : f32 to vector<16x128xf32>
    %11 = arith.mulf %10, %9 : vector<16x128xf32>
    %12 = arith.addf %8, %11 : vector<16x128xf32>
    %c13_i32 = arith.constant 13 : i32
    %13 = tpu.dynamic_rotate %1 by %c13_i32 dim 0 : vector<16x128xf32>, i32 -> vector<16x128xf32>
    %cst_4 = arith.constant -0.459877491 : f32
    %14 = vector.broadcast %cst_4 : f32 to vector<16x128xf32>
    %15 = arith.mulf %14, %13 : vector<16x128xf32>
    %16 = arith.addf %12, %15 : vector<16x128xf32>
    %c12_i32 = arith.constant 12 : i32
    %17 = tpu.dynamic_rotate %1 by %c12_i32 dim 0 : vector<16x128xf32>, i32 -> vector<16x128xf32>
    %cst_5 = arith.constant 0.8068915 : f32
    %18 = vector.broadcast %cst_5 : f32 to vector<16x128xf32>
    %19 = arith.mulf %18, %17 : vector<16x128xf32>
    %20 = arith.addf %16, %19 : vector<16x128xf32>
    %c11_i32 = arith.constant 11 : i32
    %21 = tpu.dynamic_rotate %1 by %c11_i32 dim 0 : vector<16x128xf32>, i32 -> vector<16x128xf32>
    %cst_6 = arith.constant -0.33267054 : f32
    %22 = vector.broadcast %cst_6 : f32 to vector<16x128xf32>
    %23 = arith.mulf %22, %21 : vector<16x128xf32>
    %24 = arith.addf %20, %23 : vector<16x128xf32>
    %c0_7 = arith.constant 0 : index
    %c0_8 = arith.constant 0 : index
    %c0_9 = arith.constant 0 : index
    %25 = vector.load %arg3[%c0_7, %c0_8, %c0_9] : memref<2x16x128xf32, #tpu.memory_space<vmem>>, vector<1x16x128xf32>
    %26 = vector.shape_cast %25 : vector<1x16x128xf32> to vector<16x128xf32>
    %27 = vector.shape_cast %24 : vector<16x128xf32> to vector<1x16x128xf32>
    tpu.vector_store %arg3[%c0_7, %c0_8, %c0_9], %27 {strides = array<i32>} : memref<2x16x128xf32, #tpu.memory_space<vmem>>, vector<1x16x128xf32>,
    %28 = vector.extract_strided_slice %1 {offsets = [11, 0], sizes = [5, 128], strides = [1, 1]} : vector<16x128xf32> to vector<5x128xf32>
    %cst_10 = arith.constant 0.0352262929 : f32
    %29 = vector.broadcast %cst_10 : f32 to vector<5x128xf32>
    %30 = arith.mulf %29, %28 : vector<5x128xf32>
    %31 = vector.extract_strided_slice %1 {offsets = [12, 0], sizes = [4, 128], strides = [1, 1]} : vector<16x128xf32> to vector<4x128xf32>
    %32 = tpu.concatenate %31, %2 in 0 : vector<4x128xf32>, vector<1x128xf32> -> vector<5x128xf32>
    %cst_11 = arith.constant 0.0854412764 : f32
    %33 = vector.broadcast %cst_11 : f32 to vector<5x128xf32>
    %34 = arith.mulf %33, %32 : vector<5x128xf32>
    %35 = arith.addf %30, %34 : vector<5x128xf32>
    %36 = vector.extract_strided_slice %1 {offsets = [13, 0], sizes = [3, 128], strides = [1, 1]} : vector<16x128xf32> to vector<3x128xf32>
    %37 = vector.shape_cast %2 : vector<1x128xf32> to vector<1x128xf32>
    %38 = vector.broadcast %37 : vector<1x128xf32> to vector<2x128xf32>
    %39 = tpu.concatenate %36, %38 in 0 : vector<3x128xf32>, vector<2x128xf32> -> vector<5x128xf32>
    %cst_12 = arith.constant -0.135011017 : f32
    %40 = vector.broadcast %cst_12 : f32 to vector<5x128xf32>
    %41 = arith.mulf %40, %39 : vector<5x128xf32>
    %42 = arith.addf %35, %41 : vector<5x128xf32>
    %43 = vector.extract_strided_slice %1 {offsets = [14, 0], sizes = [2, 128], strides = [1, 1]} : vector<16x128xf32> to vector<2x128xf32>
    %44 = vector.shape_cast %2 : vector<1x128xf32> to vector<1x128xf32>
    %45 = vector.broadcast %44 : vector<1x128xf32> to vector<3x128xf32>
    %46 = tpu.concatenate %43, %45 in 0 : vector<2x128xf32>, vector<3x128xf32> -> vector<5x128xf32>
    %cst_13 = arith.constant -0.459877491 : f32
    %47 = vector.broadcast %cst_13 : f32 to vector<5x128xf32>
    %48 = arith.mulf %47, %46 : vector<5x128xf32>
    %49 = arith.addf %42, %48 : vector<5x128xf32>
    %50 = vector.extract_strided_slice %1 {offsets = [15, 0], sizes = [1, 128], strides = [1, 1]} : vector<16x128xf32> to vector<1x128xf32>
    %51 = vector.shape_cast %2 : vector<1x128xf32> to vector<1x128xf32>
    %52 = vector.broadcast %51 : vector<1x128xf32> to vector<4x128xf32>
    %53 = tpu.concatenate %50, %52 in 0 : vector<1x128xf32>, vector<4x128xf32> -> vector<5x128xf32>
    %cst_14 = arith.constant 0.8068915 : f32
    %54 = vector.broadcast %cst_14 : f32 to vector<5x128xf32>
    %55 = arith.mulf %54, %53 : vector<5x128xf32>
    %56 = arith.addf %49, %55 : vector<5x128xf32>
    %57 = vector.shape_cast %2 : vector<1x128xf32> to vector<1x128xf32>
    %58 = vector.broadcast %57 : vector<1x128xf32> to vector<5x128xf32>
    %cst_15 = arith.constant -0.33267054 : f32
    %59 = vector.broadcast %cst_15 : f32 to vector<5x128xf32>
    %60 = arith.mulf %59, %58 : vector<5x128xf32>
    %61 = arith.addf %56, %60 : vector<5x128xf32>
    %c0_16 = arith.constant 0 : index
    %c11 = arith.constant 11 : index
    %c0_17 = arith.constant 0 : index
    %62 = vector.load %arg3[%c0_16, %c11, %c0_17] : memref<2x16x128xf32, #tpu.memory_space<vmem>>, vector<1x5x128xf32>
    %63 = vector.shape_cast %62 : vector<1x5x128xf32> to vector<5x128xf32>
    %64 = vector.shape_cast %61 : vector<5x128xf32> to vector<1x5x128xf32>
    tpu.vector_store %arg3[%c0_16, %c11, %c0_17], %64 {strides = array<i32>} : memref<2x16x128xf32, #tpu.memory_space<vmem>>, vector<1x5x128xf32>,
    %c1 = arith.constant 1 : index
    %c0_18 = arith.constant 0 : index
    %c0_19 = arith.constant 0 : index
    %65 = vector.load %arg2[%c1, %c0_18, %c0_19] : memref<2x16x128xf32, #tpu.memory_space<vmem>>, vector<1x16x128xf32>
    %66 = vector.shape_cast %65 : vector<1x16x128xf32> to vector<16x128xf32>
    %67 = vector.extract_strided_slice %66 {offsets = [15, 0], sizes = [1, 128], strides = [1, 1]} : vector<16x128xf32> to vector<1x128xf32>
    %cst_20 = arith.constant 0.0352262929 : f32
    %68 = vector.broadcast %cst_20 : f32 to vector<16x128xf32>
    %69 = arith.mulf %68, %66 : vector<16x128xf32>
    %c15_i32_21 = arith.constant 15 : i32
    %70 = tpu.dynamic_rotate %66 by %c15_i32_21 dim 0 : vector<16x128xf32>, i32 -> vector<16x128xf32>
    %cst_22 = arith.constant 0.0854412764 : f32
    %71 = vector.broadcast %cst_22 : f32 to vector<16x128xf32>
    %72 = arith.mulf %71, %70 : vector<16x128xf32>
    %73 = arith.addf %69, %72 : vector<16x128xf32>
    %c14_i32_23 = arith.constant 14 : i32
    %74 = tpu.dynamic_rotate %66 by %c14_i32_23 dim 0 : vector<16x128xf32>, i32 -> vector<16x128xf32>
    %cst_24 = arith.constant -0.135011017 : f32
    %75 = vector.broadcast %cst_24 : f32 to vector<16x128xf32>
    %76 = arith.mulf %75, %74 : vector<16x128xf32>
    %77 = arith.addf %73, %76 : vector<16x128xf32>
    %c13_i32_25 = arith.constant 13 : i32
    %78 = tpu.dynamic_rotate %66 by %c13_i32_25 dim 0 : vector<16x128xf32>, i32 -> vector<16x128xf32>
    %cst_26 = arith.constant -0.459877491 : f32
    %79 = vector.broadcast %cst_26 : f32 to vector<16x128xf32>
    %80 = arith.mulf %79, %78 : vector<16x128xf32>
    %81 = arith.addf %77, %80 : vector<16x128xf32>
    %c12_i32_27 = arith.constant 12 : i32
    %82 = tpu.dynamic_rotate %66 by %c12_i32_27 dim 0 : vector<16x128xf32>, i32 -> vector<16x128xf32>
    %cst_28 = arith.constant 0.8068915 : f32
    %83 = vector.broadcast %cst_28 : f32 to vector<16x128xf32>
    %84 = arith.mulf %83, %82 : vector<16x128xf32>
    %85 = arith.addf %81, %84 : vector<16x128xf32>
    %c11_i32_29 = arith.constant 11 : i32
    %86 = tpu.dynamic_rotate %66 by %c11_i32_29 dim 0 : vector<16x128xf32>, i32 -> vector<16x128xf32>
    %cst_30 = arith.constant -0.33267054 : f32
    %87 = vector.broadcast %cst_30 : f32 to vector<16x128xf32>
    %88 = arith.mulf %87, %86 : vector<16x128xf32>
    %89 = arith.addf %85, %88 : vector<16x128xf32>
    %c1_31 = arith.constant 1 : index
    %c0_32 = arith.constant 0 : index
    %c0_33 = arith.constant 0 : index
    %90 = vector.load %arg3[%c1_31, %c0_32, %c0_33] : memref<2x16x128xf32, #tpu.memory_space<vmem>>, vector<1x16x128xf32>
    %91 = vector.shape_cast %90 : vector<1x16x128xf32> to vector<16x128xf32>
    %92 = vector.shape_cast %89 : vector<16x128xf32> to vector<1x16x128xf32>
    tpu.vector_store %arg3[%c1_31, %c0_32, %c0_33], %92 {strides = array<i32>} : memref<2x16x128xf32, #tpu.memory_space<vmem>>, vector<1x16x128xf32>,
    %93 = vector.extract_strided_slice %66 {offsets = [11, 0], sizes = [5, 128], strides = [1, 1]} : vector<16x128xf32> to vector<5x128xf32>
    %cst_34 = arith.constant 0.0352262929 : f32
    %94 = vector.broadcast %cst_34 : f32 to vector<5x128xf32>
    %95 = arith.mulf %94, %93 : vector<5x128xf32>
    %96 = vector.extract_strided_slice %66 {offsets = [12, 0], sizes = [4, 128], strides = [1, 1]} : vector<16x128xf32> to vector<4x128xf32>
    %97 = tpu.concatenate %96, %67 in 0 : vector<4x128xf32>, vector<1x128xf32> -> vector<5x128xf32>
    %cst_35 = arith.constant 0.0854412764 : f32
    %98 = vector.broadcast %cst_35 : f32 to vector<5x128xf32>
    %99 = arith.mulf %98, %97 : vector<5x128xf32>
    %100 = arith.addf %95, %99 : vector<5x128xf32>
    %101 = vector.extract_strided_slice %66 {offsets = [13, 0], sizes = [3, 128], strides = [1, 1]} : vector<16x128xf32> to vector<3x128xf32>
    %102 = vector.shape_cast %67 : vector<1x128xf32> to vector<1x128xf32>
    %103 = vector.broadcast %102 : vector<1x128xf32> to vector<2x128xf32>
    %104 = tpu.concatenate %101, %103 in 0 : vector<3x128xf32>, vector<2x128xf32> -> vector<5x128xf32>
    %cst_36 = arith.constant -0.135011017 : f32
    %105 = vector.broadcast %cst_36 : f32 to vector<5x128xf32>
    %106 = arith.mulf %105, %104 : vector<5x128xf32>
    %107 = arith.addf %100, %106 : vector<5x128xf32>
    %108 = vector.extract_strided_slice %66 {offsets = [14, 0], sizes = [2, 128], strides = [1, 1]} : vector<16x128xf32> to vector<2x128xf32>
    %109 = vector.shape_cast %67 : vector<1x128xf32> to vector<1x128xf32>
    %110 = vector.broadcast %109 : vector<1x128xf32> to vector<3x128xf32>
    %111 = tpu.concatenate %108, %110 in 0 : vector<2x128xf32>, vector<3x128xf32> -> vector<5x128xf32>
    %cst_37 = arith.constant -0.459877491 : f32
    %112 = vector.broadcast %cst_37 : f32 to vector<5x128xf32>
    %113 = arith.mulf %112, %111 : vector<5x128xf32>
    %114 = arith.addf %107, %113 : vector<5x128xf32>
    %115 = vector.extract_strided_slice %66 {offsets = [15, 0], sizes = [1, 128], strides = [1, 1]} : vector<16x128xf32> to vector<1x128xf32>
    %116 = vector.shape_cast %67 : vector<1x128xf32> to vector<1x128xf32>
    %117 = vector.broadcast %116 : vector<1x128xf32> to vector<4x128xf32>
    %118 = tpu.concatenate %115, %117 in 0 : vector<1x128xf32>, vector<4x128xf32> -> vector<5x128xf32>
    %cst_38 = arith.constant 0.8068915 : f32
    %119 = vector.broadcast %cst_38 : f32 to vector<5x128xf32>
    %120 = arith.mulf %119, %118 : vector<5x128xf32>
    %121 = arith.addf %114, %120 : vector<5x128xf32>
    %122 = vector.shape_cast %67 : vector<1x128xf32> to vector<1x128xf32>
    %123 = vector.broadcast %122 : vector<1x128xf32> to vector<5x128xf32>
    %cst_39 = arith.constant -0.33267054 : f32
    %124 = vector.broadcast %cst_39 : f32 to vector<5x128xf32>
    %125 = arith.mulf %124, %123 : vector<5x128xf32>
    %126 = arith.addf %121, %125 : vector<5x128xf32>
    %c1_40 = arith.constant 1 : index
    %c11_41 = arith.constant 11 : index
    %c0_42 = arith.constant 0 : index
    %127 = vector.load %arg3[%c1_40, %c11_41, %c0_42] : memref<2x16x128xf32, #tpu.memory_space<vmem>>, vector<1x5x128xf32>
    %128 = vector.shape_cast %127 : vector<1x5x128xf32> to vector<5x128xf32>
    %129 = vector.shape_cast %126 : vector<5x128xf32> to vector<1x5x128xf32>
    tpu.vector_store %arg3[%c1_40, %c11_41, %c0_42], %129 {strides = array<i32>} : memref<2x16x128xf32, #tpu.memory_space<vmem>>, vector<1x5x128xf32>,
    return
  }
  func.func @transform_0(%arg0: i32, %arg1: i32) -> (i32, i32, i32) {
    %c0_i32 = arith.constant 0 : i32
    %c0_i32_0 = arith.constant 0 : i32
    return %arg0, %c0_i32, %arg1 : i32, i32, i32
  }
  func.func @transform_1(%arg0: i32, %arg1: i32) -> (i32, i32, i32) {
    %c0_i32 = arith.constant 0 : i32
    %c0_i32_0 = arith.constant 0 : i32
    return %arg0, %c0_i32, %arg1 : i32, i32, i32
  }
}

</mosaic_0001>

<llo_original>
// kernel: tpu_custom_call.1
$region0: #{tpu_custom_call.1}
  #allocation0 [shape = 'u32[]', space=smem, size = 0x4, offset = 0x4, fixed_abs, tag = 'smem constant byte address 0x4 - core index']
  #allocation1 [shape = 'u32[144,128]{1,0:T(1,128)}', space=vmem, size = 0x12000, scoped, tag = 'internal scratch']
  %s0 = inlined_call_operand.hbm [shape: f32[2,16,128], index: 0, kind: input, shape index: {}]
  %s1 = inlined_call_operand.hbm [shape: f32[2,16,128], index: 1, kind: output, shape index: {}]
  %s2 = sld [smem:[#allocation0]]
  $region18: #{tpu_custom_call.1} parent=0
    _
  %s4 = ssub.s32 1, %s2
  %s5 = scalar_select 0, %s4, %s2
  $region1: #{tpu_custom_call.1} parent=0
    #allocation2 [shape = 'u8[16384]{0}', space=vmem, size = 0x4000, scoped, tag = 'input window, operand 0, single buffered']
    #allocation3 [shape = 's32[1]{0}', space=sflag, size = 0x4, scoped, tag = 'scoped memory for tpu_custom_call.1']
    #allocation4 [shape = 's32[1]{0}', space=sflag, size = 0x4, scoped, tag = 'scoped memory for tpu_custom_call.1']
    #allocation5 [shape = 'u8[16384]{0}', space=vmem, size = 0x4000, scoped, tag = 'output window, operand 0, single buffered']
    %6 = vsyncpa [#allocation3], 0
    %7 = vsyncpa [#allocation4], 0
    // Predicated region
    $region2: #{tpu_custom_call.1} parent=1 // pred_check
      _
    $region3: #{tpu_custom_call.1} parent=1 // pred_check_branch
      %9 = sbr.rel (0) target = $region5
    $region4: #{tpu_custom_call.1} parent=1 // pred_region
      %s11 = ssub.s32 512, 512
      %12 = vsyncadd [#allocation3], %s11
      %s13 = sshll.u32 [#allocation2], 4
      %s14 = int_to_ptr.vmem [resolvable:$true] %s13
      %19 = dma.hbm_to_vmem [thread:$0]  %s0, 512, %s14, [#allocation3], 128, 128, 8
    $region5: #{tpu_custom_call.1} parent=1 // pred_fallthru
      _
    // Predicated region
    $region6: #{tpu_custom_call.1} parent=1 // pred_check
      _
    $region7: #{tpu_custom_call.1} parent=1 // pred_check_branch
      %21 = sbr.rel (0) target = $region9
    $region8: #{tpu_custom_call.1} parent=1 // pred_region
      %22 = dma.done [#allocation3], 512
    $region9: #{tpu_custom_call.1} parent=1 // pred_fallthru
      _
    %v23 = vld [vmem:[#allocation2] sm:$0xff]
    %v24 = vld [vmem:[#allocation2 + $0x8] sm:$0xff]
    %v25 = vmul.f32 %v23, 0.035226293
    %v26 = vmul.f32 %v24, 0.035226293
    %v27 = vrot.slane %v23, 1
    %v28 = vrot.slane %v24, 1
    %v29 = vlaneseq
    %v30 = vshrl.u32 %v29, 7
    %vm31 = vcmp.lt.s32.totalorder %v30, 7
    %v32 = vsel %vm31, %v27, %v28
    %v33 = vsel %vm31, %v28, %v27
    %v34 = vmul.f32 %v32, 0.08544128
    %v35 = vmul.f32 %v33, 0.08544128
    %v36 = vadd.f32 %v25, %v34
    %v37 = vadd.f32 %v26, %v35
    %v38 = vrot.slane %v23, 2
    %v39 = vrot.slane %v24, 2
    %vm40 = vcmp.lt.s32.totalorder %v30, 6
    %v41 = vsel %vm40, %v38, %v39
    %v42 = vsel %vm40, %v39, %v38
    %v43 = vmul.f32 %v41, -0.13501102
    %v44 = vmul.f32 %v42, -0.13501102
    %v45 = vadd.f32 %v36, %v43
    %v46 = vadd.f32 %v37, %v44
    %v47 = vrot.slane %v23, 3
    %v48 = vrot.slane %v24, 3
    %vm49 = vcmp.lt.s32.totalorder %v30, 5
    %v50 = vsel %vm49, %v47, %v48
    %v51 = vsel %vm49, %v48, %v47
    %v52 = vmul.f32 %v50, -0.4598775
    %v53 = vmul.f32 %v51, -0.4598775
    %v54 = vadd.f32 %v45, %v52
    %v55 = vadd.f32 %v46, %v53
    %v56 = vrot.slane %v23, 4
    %v57 = vrot.slane %v24, 4
    %vm58 = vcmp.lt.s32.totalorder %v30, 4
    %v59 = vsel %vm58, %v56, %v57
    %v60 = vsel %vm58, %v57, %v56
    %v61 = vmul.f32 %v59, 0.8068915
    %v62 = vmul.f32 %v60, 0.8068915
    %v63 = vadd.f32 %v54, %v61
    %v64 = vadd.f32 %v55, %v62
    %v65 = vrot.slane %v23, 5
    %v66 = vrot.slane %v24, 5
    %vm67 = vcmp.lt.s32.totalorder %v30, 3
    %v68 = vsel %vm67, %v65, %v66
    %v69 = vsel %vm67, %v66, %v65
    %v70 = vmul.f32 %v68, -0.33267054
    %v71 = vmul.f32 %v69, -0.33267054
    %v72 = vadd.f32 %v63, %v70
    %v73 = vadd.f32 %v64, %v71
    %74 = vst [vmem:[#allocation5] sm:$0xff] %v72
    %75 = vst [vmem:[#allocation5 + $0x8] sm:$0xff] %v73
    %v77 = vrot.slane %v24, 4
    %v79 = vrot.slane %v24, 3
    %vm81 = vcmask 1043456
    %v82 = vsel %vm81, %v77, %v79
    %v83 = vmul.f32 %v82, 0.08544128
    %v85 = vrot.slane %v83, 5
    %v87 = vadd.f32 %v26, %v85
    %v88 = vlaneseq
    %v89 = vshrl.u32 %v88, 7
    %v90 = vsub.s32 7, %v89
    %v91 = vrot.slane %v24, %v90
    %v92 = vrot.slane %v24, 5
    %vm94 = vcmask 1042432
    %v95 = vsel %vm94, %v92, %v91
    %v96 = vmul.f32 %v95, -0.13501102
    %v98 = vrot.slane %v96, 5
    %v100 = vadd.f32 %v87, %v98
    %v101 = vrot.slane %v24, 6
    %vm103 = vcmask 1041408
    %v104 = vsel %vm103, %v101, %v91
    %v105 = vmul.f32 %v104, -0.4598775
    %v107 = vrot.slane %v105, 5
    %v109 = vadd.f32 %v100, %v107
    %v110 = vrot.slane %v24, 7
    %vm112 = vcmask 1040384
    %v113 = vsel %vm112, %v110, %v91
    %v114 = vmul.f32 %v113, 0.8068915
    %v116 = vrot.slane %v114, 5
    %v118 = vadd.f32 %v109, %v116
    %v119 = vmul.f32 %v91, -0.33267054
    %v120 = vadd.f32 %v118, %v119
    %121 = vst [vmem:[#allocation5 + $0x8] sm:$0xf8] %v120
    %s122 = scalar_lea.vmem [#allocation2], 16
    %v123 = vld [vmem:[%s122] sm:$0xff]
    %v124 = vld [vmem:[%s122 + $0x8] sm:$0xff]
    %v125 = vmul.f32 %v123, 0.035226293
    %v126 = vmul.f32 %v124, 0.035226293
    %v127 = vrot.slane %v123, 1
    %v128 = vrot.slane %v124, 1
    %v129 = vsel %vm31, %v127, %v128
    %v130 = vsel %vm31, %v128, %v127
    %v131 = vmul.f32 %v129, 0.08544128
    %v132 = vmul.f32 %v130, 0.08544128
    %v133 = vadd.f32 %v125, %v131
    %v134 = vadd.f32 %v126, %v132
    %v135 = vrot.slane %v123, 2
    %v136 = vrot.slane %v124, 2
    %v137 = vsel %vm40, %v135, %v136
    %v138 = vsel %vm40, %v136, %v135
    %v139 = vmul.f32 %v137, -0.13501102
    %v140 = vmul.f32 %v138, -0.13501102
    %v141 = vadd.f32 %v133, %v139
    %v142 = vadd.f32 %v134, %v140
    %v143 = vrot.slane %v123, 3
    %v144 = vrot.slane %v124, 3
    %v145 = vsel %vm49, %v143, %v144
    %v146 = vsel %vm49, %v144, %v143
    %v147 = vmul.f32 %v145, -0.4598775
    %v148 = vmul.f32 %v146, -0.4598775
    %v149 = vadd.f32 %v141, %v147
    %v150 = vadd.f32 %v142, %v148
    %v151 = vrot.slane %v123, 4
    %v152 = vrot.slane %v124, 4
    %v153 = vsel %vm58, %v151, %v152
    %v154 = vsel %vm58, %v152, %v151
    %v155 = vmul.f32 %v153, 0.8068915
    %v156 = vmul.f32 %v154, 0.8068915
    %v157 = vadd.f32 %v149, %v155
    %v158 = vadd.f32 %v150, %v156
    %v159 = vrot.slane %v123, 5
    %v160 = vrot.slane %v124, 5
    %v161 = vsel %vm67, %v159, %v160
    %v162 = vsel %vm67, %v160, %v159
    %v163 = vmul.f32 %v161, -0.33267054
    %v164 = vmul.f32 %v162, -0.33267054
    %v165 = vadd.f32 %v157, %v163
    %v166 = vadd.f32 %v158, %v164
    %s167 = scalar_lea.vmem [#allocation5], 16
    %168 = vst [vmem:[%s167] sm:$0xff] %v165
    %169 = vst [vmem:[%s167 + $0x8] sm:$0xff] %v166
    %v171 = vrot.slane %v124, 4
    %v173 = vrot.slane %v124, 3
    %v175 = vsel %vm81, %v171, %v173
    %v176 = vmul.f32 %v175, 0.08544128
    %v178 = vrot.slane %v176, 5
    %v180 = vadd.f32 %v126, %v178
    %v181 = vlaneseq
    %v182 = vshrl.u32 %v181, 7
    %v183 = vsub.s32 7, %v182
    %v184 = vrot.slane %v124, %v183
    %v185 = vrot.slane %v124, 5
    %v187 = vsel %vm94, %v185, %v184
    %v188 = vmul.f32 %v187, -0.13501102
    %v190 = vrot.slane %v188, 5
    %v192 = vadd.f32 %v180, %v190
    %v193 = vrot.slane %v124, 6
    %v195 = vsel %vm103, %v193, %v184
    %v196 = vmul.f32 %v195, -0.4598775
    %v198 = vrot.slane %v196, 5
    %v200 = vadd.f32 %v192, %v198
    %v201 = vrot.slane %v124, 7
    %v203 = vsel %vm112, %v201, %v184
    %v204 = vmul.f32 %v203, 0.8068915
    %v206 = vrot.slane %v204, 5
    %v208 = vadd.f32 %v200, %v206
    %v209 = vmul.f32 %v184, -0.33267054
    %v210 = vadd.f32 %v208, %v209
    %211 = vst [vmem:[%s167 + $0x8] sm:$0xf8] %v210
    // Predicated region
    $region10: #{tpu_custom_call.1} parent=1 // pred_check
      _
    $region11: #{tpu_custom_call.1} parent=1 // pred_check_branch
      %213 = sbr.rel (0) target = $region13
    $region12: #{tpu_custom_call.1} parent=1 // pred_region
      %s215 = ssub.s32 512, 512
      %216 = vsyncadd [#allocation4], %s215
      %s217 = sshll.u32 [#allocation5], 4
      %s218 = int_to_ptr.vmem [resolvable:$true] %s217
      %223 = dma.vmem_to_hbm [thread:$0]  %s218, 512, %s1, [#allocation4], 128, 128, 8
    $region13: #{tpu_custom_call.1} parent=1 // pred_fallthru
      _
    // Predicated region
    $region14: #{tpu_custom_call.1} parent=1 // pred_check
      _
    $region15: #{tpu_custom_call.1} parent=1 // pred_check_branch
      %225 = sbr.rel (0) target = $region17
    $region16: #{tpu_custom_call.1} parent=1 // pred_region
      %226 = dma.done [#allocation4], 512
    $region17: #{tpu_custom_call.1} parent=1 // pred_fallthru
      _
    %227 = vsyncpa [#allocation3], 1
    %228 = vsyncpa [#allocation4], 1

</llo_original>
